<compile_context>
chip_gen: v7x
topology: tpu7x:2x2x1
jax: 0.10.0
libtpu: 0.0.40
codegen_flags: <defaults>
</compile_context>

<pallas_src>
import functools

import jax
import jax.numpy as jnp
from jax.experimental import pallas as pl
from jax.experimental.pallas import tpu as pltpu

_LANE = 128
_NEG_BIG = -1e30       # padded-logit bias: exp(-1e30 - m) underflows to exactly 0
                       # (assumes real logits never approach -1e30)
_NO_GRID_MAX_B = 256   # tiny-batch fast path threshold (decoupled from tile_b)


def actor_kernel(x_ref, w1_ref, b1_ref, w2_ref, b2_ref, o_ref):
    """Fused Linear -> ReLU -> Linear -> stable softmax, all VMEM resident.

    Second-layer weights/bias are padded to a lane-dense width (multiple of
    128) so every MXU/VPU/XLU op runs on full vregs, but only the first
    d_out = o_ref.shape[-1] probability columns are stored back to HBM.
    """
    x = x_ref[...]                                                    # (TB, D_in)
    h = jnp.dot(x, w1_ref[...], preferred_element_type=jnp.float32) + b1_ref[...]
    h = jnp.maximum(h, 0.0)                                           # ReLU, f32 VPU
    logits = jnp.dot(h.astype(w2_ref.dtype), w2_ref[...],
                     preferred_element_type=jnp.float32) + b2_ref[...]
    # Numerically-stable softmax along the (lane-dense, padded) last axis.
    # Padded columns carry bias -1e30 -> exp() == 0, so they never touch the sum.
    m = jnp.max(logits, axis=-1, keepdims=True)
    e = jnp.exp(logits - m)
    denom = jnp.sum(e, axis=-1, keepdims=True)                        # >= 1 always
    r = pl.reciprocal(denom, approx=True)                             # EUP (free slot)
    r = r * (2.0 - denom * r)                                         # 1 Newton step
    d_out = o_ref.shape[-1]                                           # real columns only
    o_ref[...] = (e[:, :d_out] * r).astype(o_ref.dtype)


def _pad_output_params(w2, b2, mm_dtype):
    """Pad second-layer params to a lane-dense (multiple of 128) output width."""
    H, d_out = w2.shape
    d_pad = max(_LANE, pl.cdiv(d_out, _LANE) * _LANE)
    b2 = b2.reshape(1, d_out).astype(jnp.float32)
    w2 = w2.astype(mm_dtype)
    if d_pad == d_out:
        return w2, b2, d_pad
    w2p = jnp.zeros((H, d_pad), mm_dtype).at[:, :d_out].set(w2)
    b2p = jnp.full((1, d_pad), _NEG_BIG, jnp.float32).at[:, :d_out].set(b2)
    return w2p, b2p, d_pad


@functools.partial(jax.jit, static_argnames=("tile_b", "use_bf16"))
def actor_forward(state, w1, b1, w2, b2, *, tile_b=2048, use_bf16=False):
    """Actor forward pass. state: (B, D_in). Returns (B, D_out) softmax probs (f32)."""
    B, d_in = state.shape
    H = w1.shape[1]
    d_out = w2.shape[1]

    mm_dtype = jnp.bfloat16 if use_bf16 else jnp.float32
    state = state.astype(mm_dtype)
    w1 = w1.astype(mm_dtype)
    b1 = b1.reshape(1, H).astype(jnp.float32)
    w2p, b2p, d_pad = _pad_output_params(w2, b2, mm_dtype)

    if B <= _NO_GRID_MAX_B:
        # Tiny-batch path: everything fits VMEM; no grid => no pipeline overhead.
        return pl.pallas_call(
            actor_kernel,
            out_shape=jax.ShapeDtypeStruct((B, d_out), jnp.float32),
        )(state, w1, b1, w2p, b2p)

    # Large-batch path: tile the batch axis; weights stay VMEM-resident.
    # No explicit batch padding: Pallas masks the ragged last block (per-row
    # softmax, rows independent), so there is no extra HBM pad / slice pass.
    n_tiles = pl.cdiv(B, tile_b)
    return pl.pallas_call(
        actor_kernel,
        out_shape=jax.ShapeDtypeStruct((B, d_out), jnp.float32),
        grid=(n_tiles,),
        in_specs=[
            pl.BlockSpec((tile_b, d_in), lambda i: (i, 0)),   # stream batch rows
            pl.BlockSpec((d_in, H), lambda i: (0, 0)),        # resident weights
            pl.BlockSpec((1, H), lambda i: (0, 0)),
            pl.BlockSpec((H, d_pad), lambda i: (0, 0)),
            pl.BlockSpec((1, d_pad), lambda i: (0, 0)),
        ],
        out_specs=pl.BlockSpec((tile_b, d_out), lambda i: (i, 0)),
        compiler_params=pltpu.CompilerParams(
            dimension_semantics=("parallel",),   # batch axis shards across TCs (v7x)
            # Per-step live set (f32): 2*(tile_b*d_in) input bufs + 2*(tile_b*d_out)
            # output bufs + ~3*(tile_b*128) temporaries + small weights.
            # tile_b=2048 ~ 5 MiB, tile_b=4096 ~ 9-10 MiB -> well under v7x's
            # 32 MiB scoped / 64 MiB physical VMEM (and trivially under v5e/v6e).
            vmem_limit_bytes=32 * 1024 * 1024,
        ),
    )(state, w1, b1, w2p, b2p)


def init_params(key, input_dim, hidden_dim, output_dim):
    # PyTorch Linear default init: U(-1/sqrt(fan_in), 1/sqrt(fan_in)).
    k1, k2, k3, k4 = jax.random.split(key, 4)
    bound1 = 1.0 / jnp.sqrt(input_dim)
    bound2 = 1.0 / jnp.sqrt(hidden_dim)
    w1 = jax.random.uniform(k1, (input_dim, hidden_dim), jnp.float32, -bound1, bound1)
    b1 = jax.random.uniform(k2, (1, hidden_dim), jnp.float32, -bound1, bound1)
    w2 = jax.random.uniform(k3, (hidden_dim, output_dim), jnp.float32, -bound2, bound2)
    b2 = jax.random.uniform(k4, (1, output_dim), jnp.float32, -bound2, bound2)
    return w1, b1, w2, b2


def actor_reference(state, w1, b1, w2, b2):
    h = jnp.maximum(state @ w1 + b1.reshape(1, -1), 0.0)
    logits = h @ w2 + b2.reshape(1, -1)
    return jax.nn.softmax(logits, axis=-1)


if __name__ == "__main__":
    key = jax.random.PRNGKey(0)
    input_dim, hidden_dim, output_dim = 32, 128, 8
    k_params, k_state, k_state2 = jax.random.split(key, 3)
    w1, b1, w2, b2 = init_params(k_params, input_dim, hidden_dim, output_dim)

    # --- tiny-batch (no-grid) path, f32 ---
    batch = 8
    state = jax.random.normal(k_state, (batch, input_dim), jnp.float32)
    out = jax.block_until_ready(actor_forward(state, w1, b1, w2, b2))
    ref = actor_reference(state, w1, b1, w2, b2)
    assert out.shape == (batch, output_dim)
    assert jnp.allclose(out, ref, atol=1e-4, rtol=1e-4), "small-batch mismatch vs reference"
    assert jnp.allclose(jnp.sum(out, axis=-1), 1.0, atol=1e-4), "softmax rows must sum to 1"

    # --- gridded path (exercises ragged last block: 272 = 2*128 + 16), f32 ---
    big_batch = 272
    state_big = jax.random.normal(k_state2, (big_batch, input_dim), jnp.float32)
    out_big = jax.block_until_ready(
        actor_forward(state_big, w1, b1, w2, b2, tile_b=128))
    ref_big = actor_reference(state_big, w1, b1, w2, b2)
    assert out_big.shape == (big_batch, output_dim)
    assert jnp.allclose(out_big, ref_big, atol=1e-4, rtol=1e-4), "tiled mismatch vs reference"
    assert jnp.allclose(jnp.sum(out_big, axis=-1), 1.0, atol=1e-4), "softmax rows must sum to 1"

    # --- bf16 matmul-operand path (native MXU dtype on v5e/v6e/v7x); looser tol ---
    out_bf16 = jax.block_until_ready(
        actor_forward(state_big, w1, b1, w2, b2, tile_b=128, use_bf16=True))
    assert out_bf16.shape == (big_batch, output_dim)
    assert jnp.allclose(out_bf16, ref_big, atol=5e-2, rtol=5e-2), "bf16 path mismatch"
    assert jnp.allclose(jnp.sum(out_bf16, axis=-1), 1.0, atol=1e-2), "bf16 rows must sum to 1"

    print("KERNEL_OK")
</pallas_src>

<mosaic_0001>
module attributes {stable_mosaic.version = 11 : i64} {
  func.func @actor_kernel(%arg0: memref<8x32xf32, #tpu.memory_space<vmem>>, %arg1: memref<32x128xf32, #tpu.memory_space<vmem>>, %arg2: memref<1x128xf32, #tpu.memory_space<vmem>>, %arg3: memref<128x128xf32, #tpu.memory_space<vmem>>, %arg4: memref<1x128xf32, #tpu.memory_space<vmem>>, %arg5: memref<8x8xf32, #tpu.memory_space<vmem>>) attributes {dimension_semantics = [], scalar_prefetch = 0 : i64, scratch_operands = 0 : i64, tpu.core_type = #tpu.core_type<tc>} {
    %c0 = arith.constant 0 : index
    %c0_0 = arith.constant 0 : index
    %0 = vector.load %arg0[%c0, %c0_0] : memref<8x32xf32, #tpu.memory_space<vmem>>, vector<8x32xf32>
    %c0_1 = arith.constant 0 : index
    %c0_2 = arith.constant 0 : index
    %1 = vector.load %arg1[%c0_1, %c0_2] : memref<32x128xf32, #tpu.memory_space<vmem>>, vector<32x128xf32>
    %cst = arith.constant dense<0.000000e+00> : vector<8x128xf32>
    %2 = tpu.matmul %0, %1, %cst {dimension_numbers = #tpu.dot_dimension_numbers<[1], [0], [0], [1], [0, 0, 1, 1], [], []>} : vector<8x32xf32>, vector<32x128xf32>, vector<8x128xf32> -> vector<8x128xf32>
    %c0_3 = arith.constant 0 : index
    %c0_4 = arith.constant 0 : index
    %3 = vector.load %arg2[%c0_3, %c0_4] : memref<1x128xf32, #tpu.memory_space<vmem>>, vector<1x128xf32>
    %4 = vector.broadcast %3 : vector<1x128xf32> to vector<8x128xf32>
    %5 = arith.addf %2, %4 : vector<8x128xf32>
    %cst_5 = arith.constant 0.000000e+00 : f32
    %6 = vector.broadcast %cst_5 : f32 to vector<8x128xf32>
    %7 = arith.maximumf %5, %6 : vector<8x128xf32>
    %c0_6 = arith.constant 0 : index
    %c0_7 = arith.constant 0 : index
    %8 = vector.load %arg3[%c0_6, %c0_7] : memref<128x128xf32, #tpu.memory_space<vmem>>, vector<128x128xf32>
    %cst_8 = arith.constant dense<0.000000e+00> : vector<8x128xf32>
    %9 = tpu.matmul %7, %8, %cst_8 {dimension_numbers = #tpu.dot_dimension_numbers<[1], [0], [0], [1], [0, 0, 1, 1], [], []>} : vector<8x128xf32>, vector<128x128xf32>, vector<8x128xf32> -> vector<8x128xf32>
    %c0_9 = arith.constant 0 : index
    %c0_10 = arith.constant 0 : index
    %10 = vector.load %arg4[%c0_9, %c0_10] : memref<1x128xf32, #tpu.memory_space<vmem>>, vector<1x128xf32>
    %11 = vector.broadcast %10 : vector<1x128xf32> to vector<8x128xf32>
    %12 = arith.addf %9, %11 : vector<8x128xf32>
    %cst_11 = arith.constant dense<0xFF800000> : vector<8xf32>
    %13 = vector.multi_reduction <maximumf>, %12, %cst_11 [1] : vector<8x128xf32> to vector<8xf32>
    %14 = vector.shape_cast %13 : vector<8xf32> to vector<8x1xf32>
    %15 = vector.broadcast %14 : vector<8x1xf32> to vector<8x128xf32>
    %16 = arith.subf %12, %15 : vector<8x128xf32>
    %17 = math.exp %16 : vector<8x128xf32>
    %cst_12 = arith.constant dense<0.000000e+00> : vector<8xf32>
    %18 = vector.multi_reduction <add>, %17, %cst_12 [1] : vector<8x128xf32> to vector<8xf32>
    %19 = vector.shape_cast %18 : vector<8xf32> to vector<8x1xf32>
    %20 = tpu.reciprocal %19 {approx = true} : vector<8x1xf32> -> vector<8x1xf32>
    %21 = arith.mulf %19, %20 : vector<8x1xf32>
    %cst_13 = arith.constant 2.000000e+00 : f32
    %22 = vector.broadcast %cst_13 : f32 to vector<8x1xf32>
    %23 = arith.subf %22, %21 : vector<8x1xf32>
    %24 = arith.mulf %20, %23 : vector<8x1xf32>
    %25 = vector.extract_strided_slice %17 {offsets = [0, 0], sizes = [8, 8], strides = [1, 1]} : vector<8x128xf32> to vector<8x8xf32>
    %26 = vector.broadcast %24 : vector<8x1xf32> to vector<8x8xf32>
    %27 = arith.mulf %25, %26 : vector<8x8xf32>
    %c0_14 = arith.constant 0 : index
    %c0_15 = arith.constant 0 : index
    %28 = vector.load %arg5[%c0_14, %c0_15] : memref<8x8xf32, #tpu.memory_space<vmem>>, vector<8x8xf32>
    tpu.vector_store %arg5[%c0_14, %c0_15], %27 {strides = array<i32>} : memref<8x8xf32, #tpu.memory_space<vmem>>, vector<8x8xf32>,
    return
  }
}

</mosaic_0001>

<llo_original>
// kernel: actor_forward.1
$region0: #{actor_forward.1}
  #allocation0 [shape = 'u32[]', space=smem, size = 0x4, offset = 0x4, fixed_abs, tag = 'smem constant byte address 0x4 - core index']
  #allocation1 [shape = 'u32[144,128]{1,0:T(1,128)}', space=vmem, size = 0x12000, scoped, tag = 'internal scratch']
  %s0 = inlined_call_operand.vmem [shape: f32[8,32], index: 0, kind: input, shape index: {}]
  %s1 = inlined_call_operand.vmem [shape: f32[32,128], index: 1, kind: input, shape index: {}]
  %s2 = inlined_call_operand.vmem [shape: f32[1,128], index: 2, kind: input, shape index: {}]
  %s3 = inlined_call_operand.vmem [shape: f32[128,128], index: 3, kind: input, shape index: {}]
  %s4 = inlined_call_operand.vmem [shape: f32[1,128], index: 4, kind: input, shape index: {}]
  %s5 = inlined_call_operand.hbm [shape: f32[8,8], index: 5, kind: output, shape index: {}]
  %s6 = sld [smem:[#allocation0]]
  $region30: #{actor_forward.1} parent=0
    _
  %s8 = ssub.s32 1, %s6
  %s9 = scalar_select 0, %s8, %s6
  $region1: #{actor_forward.1} parent=0
    #allocation2 [shape = 'u8[4096]{0}', space=vmem, size = 0x1000, scoped, tag = 'output window, operand 0, single buffered']
    #allocation3 [shape = 's32[1]{0}', space=sflag, size = 0x4, scoped, tag = 'scoped memory for actor_forward.1']
    %10 = vsyncpa [#allocation3], 0
    // Predicated region
    $region2: #{actor_forward.1} parent=1 // pred_check
      _
    $region3: #{actor_forward.1} parent=1 // pred_check_branch
      %12 = sbr.rel (0) target = $region5
    $region4: #{actor_forward.1} parent=1 // pred_region
      _
    $region5: #{actor_forward.1} parent=1 // pred_fallthru
      _
    // Predicated region
    $region6: #{actor_forward.1} parent=1 // pred_check
      _
    $region7: #{actor_forward.1} parent=1 // pred_check_branch
      %14 = sbr.rel (0) target = $region9
    $region8: #{actor_forward.1} parent=1 // pred_region
      _
    $region9: #{actor_forward.1} parent=1 // pred_fallthru
      _
    // Predicated region
    $region10: #{actor_forward.1} parent=1 // pred_check
      _
    $region11: #{actor_forward.1} parent=1 // pred_check_branch
      %16 = sbr.rel (0) target = $region13
    $region12: #{actor_forward.1} parent=1 // pred_region
      _
    $region13: #{actor_forward.1} parent=1 // pred_fallthru
      _
    // Predicated region
    $region14: #{actor_forward.1} parent=1 // pred_check
      _
    $region15: #{actor_forward.1} parent=1 // pred_check_branch
      %18 = sbr.rel (0) target = $region17
    $region16: #{actor_forward.1} parent=1 // pred_region
      _
    $region17: #{actor_forward.1} parent=1 // pred_fallthru
      _
    // Predicated region
    $region18: #{actor_forward.1} parent=1 // pred_check
      _
    $region19: #{actor_forward.1} parent=1 // pred_check_branch
      %20 = sbr.rel (0) target = $region21
    $region20: #{actor_forward.1} parent=1 // pred_region
      _
    $region21: #{actor_forward.1} parent=1 // pred_fallthru
      _
    %v21 = vld [vmem:[%s0] sm:$0xff]
    %v22 = vld [vmem:[%s1] sm:$0xff]
    %v23 = vld [vmem:[%s1 + $0x8] sm:$0xff]
    %v24 = vld [vmem:[%s1 + $0x10] sm:$0xff]
    %v25 = vld [vmem:[%s1 + $0x18] sm:$0xff]
    %v26 = vld [vmem:[%s2] sm:$0x1]
    %v28 = vlaneseq
    %v29 = vshrl.u32 %v28, 7
    %v30 = vsub.s32 0, %v29
    %v31 = vrot.slane %v26, %v30
    %vm33 = vcmask 261120
    %v35 = vsel %vm33, %v21, 0
    %37 = vmatprep.subr.mxu0 0.0
    %38 = vmatpush1.msra.mxu0 %v22
    %39 = vmatprep.subr.mxu0 0.0
    %40 = vmatpush1.msra.mxu0 %v23
    %41 = vmatprep.subr.mxu0 0.0
    %42 = vmatpush1.msra.mxu0 %v24
    %43 = vmatprep.subr.mxu0 0.0
    %44 = vmatpush1.msra.mxu0 %v25
    %45 = vmatprep.subr.mxu0 0.0
    %46 = vmatpush1.msra.mxu0 0.0
    %47 = vmatprep.subr.mxu0 0.0
    %48 = vmatpush1.msra.mxu0 0.0
    %49 = vmatprep.subr.mxu0 0.0
    %50 = vmatpush1.msra.mxu0 0.0
    %51 = vmatprep.subr.mxu0 0.0
    %52 = vmatpush1.msra.mxu0 0.0
    %53 = vmatprep.subr.mxu0 0.0
    %54 = vmatpush1.msra.mxu0 0.0
    %55 = vmatprep.subr.mxu0 0.0
    %56 = vmatpush1.msra.mxu0 0.0
    %57 = vmatprep.subr.mxu0 0.0
    %58 = vmatpush1.msra.mxu0 0.0
    %59 = vmatprep.subr.mxu0 0.0
    %60 = vmatpush1.msra.mxu0 0.0
    %61 = vmatprep.subr.mxu0 0.0
    %62 = vmatpush1.msra.mxu0 0.0
    %63 = vmatprep.subr.mxu0 0.0
    %64 = vmatpush1.msra.mxu0 0.0
    %65 = vmatprep.subr.mxu0 0.0
    %66 = vmatpush1.msra.mxu0 0.0
    %67 = vmatprep.subr.mxu0 0.0
    %68 = vmatpush1.msra.mxu0 0.0
    %69 = vmatprep.subr.mxu0 0.0
    %70 = vmatpush1.msra.mxu0 0.0
    %71 = vmatprep.subr.mxu0 0.0
    %72 = vmatpush1.msra.mxu0 0.0
    %73 = vmatprep.subr.mxu0 0.0
    %74 = vmatpush1.msra.mxu0 0.0
    %75 = vmatprep.subr.mxu0 0.0
    %76 = vmatpush1.msra.mxu0 0.0
    %77 = vmatprep.subr.mxu0 0.0
    %78 = vmatpush1.msra.mxu0 0.0
    %79 = vmatprep.subr.mxu0 0.0
    %80 = vmatpush1.msra.mxu0 0.0
    %81 = vmatprep.subr.mxu0 0.0
    %82 = vmatpush1.msra.mxu0 0.0
    %83 = vmatprep.subr.mxu0 0.0
    %84 = vmatpush1.msra.mxu0 0.0
    %85 = vmatprep.subr.mxu0 0.0
    %86 = vmatpush1.msra.mxu0 0.0
    %87 = vmatprep.subr.mxu0 0.0
    %88 = vmatpush1.msra.mxu0 0.0
    %89 = vmatprep.subr.mxu0 0.0
    %90 = vmatpush1.msra.mxu0 0.0
    %91 = vmatprep.subr.mxu0 0.0
    %92 = vmatpush1.msra.mxu0 0.0
    %93 = vmatprep.subr.mxu0 0.0
    %94 = vmatpush1.msra.mxu0 0.0
    %95 = vmatprep.subr.mxu0 0.0
    %96 = vmatpush1.msra.mxu0 0.0
    %97 = vmatprep.subr.mxu0 0.0
    %98 = vmatpush1.msra.mxu0 0.0
    %99 = vmatprep.subr.mxu0 0.0
    %100 = vmatpush1.msra.mxu0 0.0
    %101 = vmatprep.mubr.f32.mxu0 0.0
    %102 = vmatmul.mubr.f32.gmra.mrb[0].mxu0 %v35
    %v103 = vpop.f32.mrb[0].mxu0
    %v104 = vadd.f32 %v31, %v103
    %v105 = vpop.f32.mrb[0].mxu0
    %106 = vdwg.mxu0
    %v107 = vmax.f32 %v104, 0.0
    %v108 = vld [vmem:[%s3] sm:$0xff]
    %v109 = vld [vmem:[%s3 + $0x8] sm:$0xff]
    %v110 = vld [vmem:[%s3 + $0x10] sm:$0xff]
    %v111 = vld [vmem:[%s3 + $0x18] sm:$0xff]
    %v112 = vld [vmem:[%s3 + $0x20] sm:$0xff]
    %v113 = vld [vmem:[%s3 + $0x28] sm:$0xff]
    %v114 = vld [vmem:[%s3 + $0x30] sm:$0xff]
    %v115 = vld [vmem:[%s3 + $0x38] sm:$0xff]
    %v116 = vld [vmem:[%s3 + $0x40] sm:$0xff]
    %v117 = vld [vmem:[%s3 + $0x48] sm:$0xff]
    %v118 = vld [vmem:[%s3 + $0x50] sm:$0xff]
    %v119 = vld [vmem:[%s3 + $0x58] sm:$0xff]
    %v120 = vld [vmem:[%s3 + $0x60] sm:$0xff]
    %v121 = vld [vmem:[%s3 + $0x68] sm:$0xff]
    %v122 = vld [vmem:[%s3 + $0x70] sm:$0xff]
    %v123 = vld [vmem:[%s3 + $0x78] sm:$0xff]
    %v124 = vld [vmem:[%s4] sm:$0x1]
    %v126 = vlaneseq
    %v127 = vshrl.u32 %v126, 7
    %v128 = vsub.s32 0, %v127
    %v129 = vrot.slane %v124, %v128
    %131 = vmatprep.subr.mxu0 0.0
    %132 = vmatpush1.msra.mxu0 %v108
    %133 = vmatprep.subr.mxu0 0.0
    %134 = vmatpush1.msra.mxu0 %v109
    %135 = vmatprep.subr.mxu0 0.0
    %136 = vmatpush1.msra.mxu0 %v110
    %137 = vmatprep.subr.mxu0 0.0
    %138 = vmatpush1.msra.mxu0 %v111
    %139 = vmatprep.subr.mxu0 0.0
    %140 = vmatpush1.msra.mxu0 %v112
    %141 = vmatprep.subr.mxu0 0.0
    %142 = vmatpush1.msra.mxu0 %v113
    %143 = vmatprep.subr.mxu0 0.0
    %144 = vmatpush1.msra.mxu0 %v114
    %145 = vmatprep.subr.mxu0 0.0
    %146 = vmatpush1.msra.mxu0 %v115
    %147 = vmatprep.subr.mxu0 0.0
    %148 = vmatpush1.msra.mxu0 %v116
    %149 = vmatprep.subr.mxu0 0.0
    %150 = vmatpush1.msra.mxu0 %v117
    %151 = vmatprep.subr.mxu0 0.0
    %152 = vmatpush1.msra.mxu0 %v118
    %153 = vmatprep.subr.mxu0 0.0
    %154 = vmatpush1.msra.mxu0 %v119
    %155 = vmatprep.subr.mxu0 0.0
    %156 = vmatpush1.msra.mxu0 %v120
    %157 = vmatprep.subr.mxu0 0.0
    %158 = vmatpush1.msra.mxu0 %v121
    %159 = vmatprep.subr.mxu0 0.0
    %160 = vmatpush1.msra.mxu0 %v122
    %161 = vmatprep.subr.mxu0 0.0
    %162 = vmatpush1.msra.mxu0 %v123
    %163 = vmatprep.subr.mxu0 0.0
    %164 = vmatpush1.msra.mxu0 0.0
    %165 = vmatprep.subr.mxu0 0.0
    %166 = vmatpush1.msra.mxu0 0.0
    %167 = vmatprep.subr.mxu0 0.0
    %168 = vmatpush1.msra.mxu0 0.0
    %169 = vmatprep.subr.mxu0 0.0
    %170 = vmatpush1.msra.mxu0 0.0
    %171 = vmatprep.subr.mxu0 0.0
    %172 = vmatpush1.msra.mxu0 0.0
    %173 = vmatprep.subr.mxu0 0.0
    %174 = vmatpush1.msra.mxu0 0.0
    %175 = vmatprep.subr.mxu0 0.0
    %176 = vmatpush1.msra.mxu0 0.0
    %177 = vmatprep.subr.mxu0 0.0
    %178 = vmatpush1.msra.mxu0 0.0
    %179 = vmatprep.subr.mxu0 0.0
    %180 = vmatpush1.msra.mxu0 0.0
    %181 = vmatprep.subr.mxu0 0.0
    %182 = vmatpush1.msra.mxu0 0.0
    %183 = vmatprep.subr.mxu0 0.0
    %184 = vmatpush1.msra.mxu0 0.0
    %185 = vmatprep.subr.mxu0 0.0
    %186 = vmatpush1.msra.mxu0 0.0
    %187 = vmatprep.subr.mxu0 0.0
    %188 = vmatpush1.msra.mxu0 0.0
    %189 = vmatprep.subr.mxu0 0.0
    %190 = vmatpush1.msra.mxu0 0.0
    %191 = vmatprep.subr.mxu0 0.0
    %192 = vmatpush1.msra.mxu0 0.0
    %193 = vmatprep.subr.mxu0 0.0
    %194 = vmatpush1.msra.mxu0 0.0
    %195 = vmatprep.mubr.f32.mxu0 0.0
    %196 = vmatmul.mubr.f32.gmra.mrb[0].mxu0 %v107
    %v197 = vpop.f32.mrb[0].mxu0
    %v198 = vadd.f32 %v129, %v197
    %v199 = vpop.f32.mrb[0].mxu0
    %200 = vdwg.mxu0
    %201 = vmax.xlane.f32.xlu0 %v198
    %v202 = vpop.xlane.xlu0 %201
    %v203 = vsub.f32 %v198, %v202
    %v204 = vmul.f32 %v203, 1.442695
    %v205 = vpow.pop %v204
    %206 = vadd.xlane.f32.xlu0 %v205
    %v207 = vpop.xlane.xlu0 %206
    %v208 = vrcp.pop %v207
    %v209 = vmul.f32 %v207, %v208
    %v210 = vsub.f32 2.0, %v209
    %v211 = vmul.f32 %v208, %v210
    %v212 = vmul.f32 %v205, %v211
    %vm213 = vcmask 64512
    %214 = vst.msk [vmem:[#allocation2] sm:$0xff] %vm213, %v212
    // Predicated region
    $region22: #{actor_forward.1} parent=1 // pred_check
      _
    $region23: #{actor_forward.1} parent=1 // pred_check_branch
      %216 = sbr.rel (0) target = $region25
    $region24: #{actor_forward.1} parent=1 // pred_region
      %s218 = ssub.s32 128, 128
      %219 = vsyncadd [#allocation3], %s218
      %s221 = sshll.u32 [#allocation2], 4
      %s222 = int_to_ptr.vmem [resolvable:$true] %s221
      %224 = dma.vmem_to_hbm [thread:$0]  %s222, 128, %s5, [#allocation3]
    $region25: #{actor_forward.1} parent=1 // pred_fallthru
      _
    // Predicated region
    $region26: #{actor_forward.1} parent=1 // pred_check
      _
    $region27: #{actor_forward.1} parent=1 // pred_check_branch
      %226 = sbr.rel (0) target = $region29
    $region28: #{actor_forward.1} parent=1 // pred_region
      %227 = dma.done [#allocation3], 128
    $region29: #{actor_forward.1} parent=1 // pred_fallthru
      _
    %228 = vsyncpa [#allocation3], 1

</llo_original>
